<compile_context>
chip_gen: v6e
topology: v6e:2x2x1
jax: 0.10.0
libtpu: 0.0.40
codegen_flags: <defaults>
</compile_context>

<pallas_src>
import functools

import jax
import jax.numpy as jnp
from jax import lax
from jax.experimental import pallas as pl
from jax.experimental.pallas import tpu as pltpu

_LANE_CHUNK = 512  # lanes per register-resident inner chunk: (16, 512) f32 = 8 vregs


def _round_up(x, m):
    return (x + m - 1) // m * m


def _cdiv(a, b):
    return -(-a // b)


def _tile(B, block_m):
    """Choose (bm, Bp, grid_steps).

    bm is a multiple of _LANE_CHUNK; padding waste is bounded by splitting the
    128-padded batch evenly across grid steps; for batches big enough we keep
    >= 2 grid steps so the 'parallel' axis can shard across both v7x TensorCores.
    """
    block_m = max(_LANE_CHUNK, _round_up(block_m, _LANE_CHUNK))
    g = max(1, _cdiv(B, block_m))
    if g == 1 and B > 2 * _LANE_CHUNK:
        g = 2  # keep both v7x TensorCores busy
    bm = _round_up(_cdiv(B, g), _LANE_CHUNK)
    Bp = bm * g
    return bm, Bp, g


def mlp_kernel(x_ref, w1_ref, b1_ref, w2_ref, b2_ref, w3t_ref, b3_ref, o_ref):
    # x_ref:  (2, bm)   batch on lanes
    # w1_ref: (16, 2)   b1_ref: (16, 1)
    # w2_ref: (16, 16)  b2_ref: (16, 1)
    # w3t_ref:(16, 1)   b3_ref: (1, 1)
    # o_ref:  (1, bm)   lane-dense output block
    bm = x_ref.shape[1]
    chunk = min(_LANE_CHUNK, bm)
    n_chunks = bm // chunk  # bm is a multiple of _LANE_CHUNK by construction

    # Weights/biases loaded (and sliced) once, outside the chunk loop.
    w1 = w1_ref[...]
    w1a = w1[:, 0:1]                  # (16, 1)
    w1b = w1[:, 1:2]                  # (16, 1)
    b1 = b1_ref[...]                  # (16, 1)
    w2 = w2_ref[...]                  # (16, 16)
    b2 = b2_ref[...]                  # (16, 1)
    w3t = w3t_ref[...]                # (16, 1)
    b3 = b3_ref[...]                  # (1, 1)

    def body(c, carry):
        start = pl.multiple_of(c * chunk, chunk)
        x = x_ref[:, pl.ds(start, chunk)]                     # (2, chunk)

        # Layer 1 (K = 2): VPU broadcast multiply-adds; h1 stays in vregs.
        h1 = w1a * x[0:1, :] + w1b * x[1:2, :] + b1           # (16, chunk)
        h1 = jnp.maximum(h1, 0.0)

        # Layer 2 (16x16): MXU matmul with f32 accumulation.
        h2 = jnp.dot(w2, h1, preferred_element_type=jnp.float32) + b2
        h2 = jnp.maximum(h2, 0.0)                              # (16, chunk)

        # Layer 3 (N = 1): VPU multiply + cross-sublane (XLU) reduce, lane-dense.
        y = jnp.sum(w3t * h2, axis=0, keepdims=True) + b3      # (1, chunk)
        o_ref[:, pl.ds(start, chunk)] = y.astype(o_ref.dtype)
        return carry

    lax.fori_loop(0, n_chunks, body, 0, unroll=True)


def prepare_params(params):
    """Pack PyTorch-layout params into kernel layout ONCE (hoisted out of forward)."""
    return {
        "w1": params["w1"],                    # (16, 2)  — (out, in) is what W @ x_t wants
        "b1": params["b1"][:, None],           # (16, 1)
        "w2": params["w2"],                    # (16, 16)
        "b2": params["b2"][:, None],           # (16, 1)
        "w3t": params["w3"].T,                 # (16, 1)
        "b3": params["b3"][:, None],           # (1, 1)
    }


@functools.partial(jax.jit, static_argnames=("block_m",))
def simple_model_forward(x, kparams, *, block_m=16384):
    """x: (B, 2) float32. kparams: output of prepare_params. Returns (B, 1) float32."""
    B = x.shape[0]
    bm, Bp, g = _tile(B, block_m)

    # Lane-friendly input layout (2, Bp). transpose+pad fuse inside this jit —
    # no zeros+scatter round-trip through HBM.
    x_t = jnp.pad(x.T.astype(jnp.float32), ((0, 0), (0, Bp - B)))

    const = lambda a: pl.BlockSpec(a.shape, lambda i: (0, 0))  # grid-invariant, VMEM-resident

    out = pl.pallas_call(
        mlp_kernel,
        out_shape=jax.ShapeDtypeStruct((1, Bp), jnp.float32),
        grid=(g,),
        in_specs=[
            pl.BlockSpec((2, bm), lambda i: (0, i)),       # x tile, batch on lanes
            const(kparams["w1"]),
            const(kparams["b1"]),
            const(kparams["w2"]),
            const(kparams["b2"]),
            const(kparams["w3t"]),
            const(kparams["b3"]),
        ],
        out_specs=pl.BlockSpec((1, bm), lambda i: (0, i)),  # lane-dense output slab
        compiler_params=pltpu.CompilerParams(
            dimension_semantics=("parallel",),
        ),
    )(
        x_t,
        kparams["w1"], kparams["b1"],
        kparams["w2"], kparams["b2"],
        kparams["w3t"], kparams["b3"],
    )

    # Back to PyTorch output layout (B, 1); drop padded batch columns (>= B).
    return out[0, :B][:, None]


def init_params(key):
    """Deterministic synthetic init matching nn.Linear shapes (PyTorch (out, in) layout)."""
    ks = jax.random.split(key, 6)

    def unif(k, shape, fan_in):
        bound = 1.0 / jnp.sqrt(fan_in)
        return jax.random.uniform(k, shape, jnp.float32, -bound, bound)

    return {
        "w1": unif(ks[0], (16, 2), 2),
        "b1": unif(ks[1], (16,), 2),
        "w2": unif(ks[2], (16, 16), 16),
        "b2": unif(ks[3], (16,), 16),
        "w3": unif(ks[4], (1, 16), 16),
        "b3": unif(ks[5], (1,), 16),
    }


def reference_forward(x, params):
    h1 = jnp.maximum(x @ params["w1"].T + params["b1"], 0.0)
    h2 = jnp.maximum(h1 @ params["w2"].T + params["b2"], 0.0)
    return h2 @ params["w3"].T + params["b3"]


if __name__ == "__main__":
    key = jax.random.PRNGKey(0)
    k_param, k_x1, k_x2 = jax.random.split(key, 3)
    params = init_params(k_param)
    kparams = prepare_params(params)   # packed once, reused across calls

    # Small shape consistent with the module (in_features = 2).
    batch = 8
    x = jax.random.normal(k_x1, (batch, 2), dtype=jnp.float32)
    out = jax.block_until_ready(simple_model_forward(x, kparams))
    ref = reference_forward(x, params)
    assert out.shape == (batch, 1), out.shape
    assert jnp.allclose(out, ref, atol=1e-5, rtol=1e-5), "mismatch vs reference (batch=8)"

    # Multi-step grid + non-multiple-of-chunk batch (exercises padding + tiling + chunk loop).
    batch2 = 1000
    x2 = jax.random.normal(k_x2, (batch2, 2), dtype=jnp.float32)
    out2 = jax.block_until_ready(simple_model_forward(x2, kparams, block_m=512))
    ref2 = reference_forward(x2, params)
    assert out2.shape == (batch2, 1), out2.shape
    assert jnp.allclose(out2, ref2, atol=1e-5, rtol=1e-5), "mismatch vs reference (batch=1000)"

    print("KERNEL_OK")
</pallas_src>

<mosaic_0001>
module attributes {stable_mosaic.version = 11 : i64} {
  func.func @mlp_kernel(%arg0: i32, %arg1: memref<2x512xf32, #tpu.memory_space<vmem>>, %arg2: memref<16x2xf32, #tpu.memory_space<vmem>>, %arg3: memref<16x1xf32, #tpu.memory_space<vmem>>, %arg4: memref<16x16xf32, #tpu.memory_space<vmem>>, %arg5: memref<16x1xf32, #tpu.memory_space<vmem>>, %arg6: memref<16x1xf32, #tpu.memory_space<vmem>>, %arg7: memref<1x1xf32, #tpu.memory_space<vmem>>, %arg8: memref<1x512xf32, #tpu.memory_space<vmem>>) attributes {dimension_semantics = [#tpu.dimension_semantics<parallel>], iteration_bounds = array<i64: 1>, scalar_prefetch = 0 : i64, scratch_operands = 0 : i64, tpu.core_type = #tpu.core_type<tc>, window_params = [{transform_indices = @transform_0, window_bounds = array<i64: 2, 512>}, {pipeline_mode = #tpu.pipeline_mode<synchronous>, transform_indices = @transform_1, window_bounds = array<i64: 16, 2>}, {pipeline_mode = #tpu.pipeline_mode<synchronous>, transform_indices = @transform_2, window_bounds = array<i64: 16, 1>}, {pipeline_mode = #tpu.pipeline_mode<synchronous>, transform_indices = @transform_3, window_bounds = array<i64: 16, 16>}, {pipeline_mode = #tpu.pipeline_mode<synchronous>, transform_indices = @transform_4, window_bounds = array<i64: 16, 1>}, {pipeline_mode = #tpu.pipeline_mode<synchronous>, transform_indices = @transform_5, window_bounds = array<i64: 16, 1>}, {pipeline_mode = #tpu.pipeline_mode<synchronous>, transform_indices = @transform_6, window_bounds = array<i64: 1, 1>}, {transform_indices = @transform_7, window_bounds = array<i64: 1, 512>}]} {
    %c0 = arith.constant 0 : index
    %c0_0 = arith.constant 0 : index
    %0 = vector.load %arg2[%c0, %c0_0] : memref<16x2xf32, #tpu.memory_space<vmem>>, vector<16x2xf32>
    %1 = vector.extract_strided_slice %0 {offsets = [0, 0], sizes = [16, 1], strides = [1, 1]} : vector<16x2xf32> to vector<16x1xf32>
    %2 = vector.extract_strided_slice %0 {offsets = [0, 1], sizes = [16, 1], strides = [1, 1]} : vector<16x2xf32> to vector<16x1xf32>
    %c0_1 = arith.constant 0 : index
    %c0_2 = arith.constant 0 : index
    %3 = vector.load %arg3[%c0_1, %c0_2] : memref<16x1xf32, #tpu.memory_space<vmem>>, vector<16x1xf32>
    %c0_3 = arith.constant 0 : index
    %c0_4 = arith.constant 0 : index
    %4 = vector.load %arg4[%c0_3, %c0_4] : memref<16x16xf32, #tpu.memory_space<vmem>>, vector<16x16xf32>
    %c0_5 = arith.constant 0 : index
    %c0_6 = arith.constant 0 : index
    %5 = vector.load %arg5[%c0_5, %c0_6] : memref<16x1xf32, #tpu.memory_space<vmem>>, vector<16x1xf32>
    %c0_7 = arith.constant 0 : index
    %c0_8 = arith.constant 0 : index
    %6 = vector.load %arg6[%c0_7, %c0_8] : memref<16x1xf32, #tpu.memory_space<vmem>>, vector<16x1xf32>
    %c0_9 = arith.constant 0 : index
    %c0_10 = arith.constant 0 : index
    %7 = vector.load %arg7[%c0_9, %c0_10] : memref<1x1xf32, #tpu.memory_space<vmem>>, vector<1x1xf32>
    %c0_i32 = arith.constant 0 : i32
    %c512_i32 = arith.constant 512 : i32
    %8 = arith.muli %c0_i32, %c512_i32 : i32
    %9 = tpu.assume_multiple %8, 512 : i32
    %c0_11 = arith.constant 0 : index
    %10 = arith.index_cast %9 : i32 to index
    %11 = vector.load %arg1[%c0_11, %10] : memref<2x512xf32, #tpu.memory_space<vmem>>, vector<2x512xf32>
    %12 = vector.extract_strided_slice %11 {offsets = [0, 0], sizes = [1, 512], strides = [1, 1]} : vector<2x512xf32> to vector<1x512xf32>
    %13 = vector.broadcast %1 : vector<16x1xf32> to vector<16x512xf32>
    %14 = vector.broadcast %12 : vector<1x512xf32> to vector<16x512xf32>
    %15 = arith.mulf %13, %14 : vector<16x512xf32>
    %16 = vector.extract_strided_slice %11 {offsets = [1, 0], sizes = [1, 512], strides = [1, 1]} : vector<2x512xf32> to vector<1x512xf32>
    %17 = vector.broadcast %2 : vector<16x1xf32> to vector<16x512xf32>
    %18 = vector.broadcast %16 : vector<1x512xf32> to vector<16x512xf32>
    %19 = arith.mulf %17, %18 : vector<16x512xf32>
    %20 = arith.addf %15, %19 : vector<16x512xf32>
    %21 = vector.broadcast %3 : vector<16x1xf32> to vector<16x512xf32>
    %22 = arith.addf %20, %21 : vector<16x512xf32>
    %cst = arith.constant 0.000000e+00 : f32
    %23 = vector.broadcast %cst : f32 to vector<16x512xf32>
    %24 = arith.maximumf %22, %23 : vector<16x512xf32>
    %cst_12 = arith.constant dense<0.000000e+00> : vector<16x512xf32>
    %25 = tpu.matmul %4, %24, %cst_12 {dimension_numbers = #tpu.dot_dimension_numbers<[1], [0], [0], [1], [0, 0, 1, 1], [], []>} : vector<16x16xf32>, vector<16x512xf32>, vector<16x512xf32> -> vector<16x512xf32>
    %26 = vector.broadcast %5 : vector<16x1xf32> to vector<16x512xf32>
    %27 = arith.addf %25, %26 : vector<16x512xf32>
    %cst_13 = arith.constant 0.000000e+00 : f32
    %28 = vector.broadcast %cst_13 : f32 to vector<16x512xf32>
    %29 = arith.maximumf %27, %28 : vector<16x512xf32>
    %30 = vector.broadcast %6 : vector<16x1xf32> to vector<16x512xf32>
    %31 = arith.mulf %30, %29 : vector<16x512xf32>
    %cst_14 = arith.constant dense<0.000000e+00> : vector<512xf32>
    %32 = vector.multi_reduction <add>, %31, %cst_14 [0] : vector<16x512xf32> to vector<512xf32>
    %33 = vector.shape_cast %32 : vector<512xf32> to vector<1x512xf32>
    %34 = vector.broadcast %7 : vector<1x1xf32> to vector<1x512xf32>
    %35 = arith.addf %33, %34 : vector<1x512xf32>
    %c0_15 = arith.constant 0 : index
    %36 = arith.index_cast %9 : i32 to index
    %37 = vector.load %arg8[%c0_15, %36] : memref<1x512xf32, #tpu.memory_space<vmem>>, vector<1x512xf32>
    tpu.vector_store %arg8[%c0_15, %36], %35 {strides = array<i32>} : memref<1x512xf32, #tpu.memory_space<vmem>>, vector<1x512xf32>,
    %c1_i32 = arith.constant 1 : i32
    return
  }
  func.func @transform_0(%arg0: i32) -> (i32, i32) {
    %c0_i32 = arith.constant 0 : i32
    %c0_i32_0 = arith.constant 0 : i32
    return %c0_i32, %arg0 : i32, i32
  }
  func.func @transform_1(%arg0: i32) -> (i32, i32) {
    %c0_i32 = arith.constant 0 : i32
    %c0_i32_0 = arith.constant 0 : i32
    %c0_i32_1 = arith.constant 0 : i32
    return %c0_i32, %c0_i32_0 : i32, i32
  }
  func.func @transform_2(%arg0: i32) -> (i32, i32) {
    %c0_i32 = arith.constant 0 : i32
    %c0_i32_0 = arith.constant 0 : i32
    %c0_i32_1 = arith.constant 0 : i32
    return %c0_i32, %c0_i32_0 : i32, i32
  }
  func.func @transform_3(%arg0: i32) -> (i32, i32) {
    %c0_i32 = arith.constant 0 : i32
    %c0_i32_0 = arith.constant 0 : i32
    %c0_i32_1 = arith.constant 0 : i32
    return %c0_i32, %c0_i32_0 : i32, i32
  }
  func.func @transform_4(%arg0: i32) -> (i32, i32) {
    %c0_i32 = arith.constant 0 : i32
    %c0_i32_0 = arith.constant 0 : i32
    %c0_i32_1 = arith.constant 0 : i32
    return %c0_i32, %c0_i32_0 : i32, i32
  }
  func.func @transform_5(%arg0: i32) -> (i32, i32) {
    %c0_i32 = arith.constant 0 : i32
    %c0_i32_0 = arith.constant 0 : i32
    %c0_i32_1 = arith.constant 0 : i32
    return %c0_i32, %c0_i32_0 : i32, i32
  }
  func.func @transform_6(%arg0: i32) -> (i32, i32) {
    %c0_i32 = arith.constant 0 : i32
    %c0_i32_0 = arith.constant 0 : i32
    %c0_i32_1 = arith.constant 0 : i32
    return %c0_i32, %c0_i32_0 : i32, i32
  }
  func.func @transform_7(%arg0: i32) -> (i32, i32) {
    %c0_i32 = arith.constant 0 : i32
    %c0_i32_0 = arith.constant 0 : i32
    return %c0_i32, %arg0 : i32, i32
  }
}

</mosaic_0001>

<llo_original>
// kernel: simple_model_forward.1
$region0: #{simple_model_forward.1}
  #allocation0 [shape = 'u32[]', space=smem, size = 0x4, offset = 0x4, fixed_abs, tag = 'smem constant byte address 0x4 - core index']
  #allocation1 [shape = 'u32[144,128]{1,0:T(1,128)}', space=vmem, size = 0x12000, scoped, tag = 'internal scratch']
  #allocation2 [shape = 'f32[1,1]{1,0:T(1,128)S(1)}', space=vmem, size = 0x200, scoped, tag = 'scoped memory for simple_model_forward.1']
  %s0 = inlined_call_operand.vmem [shape: f32[2,512], index: 0, kind: input, shape index: {}]
  %s1 = inlined_call_operand.vmem [shape: f32[16,2], index: 1, kind: input, shape index: {}]
  %s2 = inlined_call_operand.vmem [shape: f32[16,1], index: 2, kind: input, shape index: {}]
  %s3 = inlined_call_operand.vmem [shape: f32[16,16], index: 3, kind: input, shape index: {}]
  %s4 = inlined_call_operand.vmem [shape: f32[16,1], index: 4, kind: input, shape index: {}]
  %s5 = inlined_call_operand.vmem [shape: f32[16,1], index: 5, kind: input, shape index: {}]
  %s6 = inlined_call_operand.<no memory space> [shape: f32[1,1], index: 6, kind: input, shape index: {}]
  %s7 = inlined_call_operand.vmem [shape: f32[1,512], index: 7, kind: output, shape index: {}]
  %s8 = sld [smem:[#allocation0]]
  $region38: #{simple_model_forward.1} parent=0
    _
  %s10 = ssub.s32 1, %s8
  %s11 = scalar_select 0, %s10, %s8
  %v12 = vstv %s6
  %13 = vst [vmem:[#allocation2] sm:$0x1] %v12
  // Predicated region
  $region2: #{simple_model_forward.1} parent=0 // pred_check
    _
  $region3: #{simple_model_forward.1} parent=0 // pred_check_branch
    %15 = sbr.rel (0) target = $region5
  $region4: #{simple_model_forward.1} parent=0 // pred_region
    _
  $region5: #{simple_model_forward.1} parent=0 // pred_fallthru
    _
  // Predicated region
  $region6: #{simple_model_forward.1} parent=0 // pred_check
    _
  $region7: #{simple_model_forward.1} parent=0 // pred_check_branch
    %17 = sbr.rel (0) target = $region9
  $region8: #{simple_model_forward.1} parent=0 // pred_region
    _
  $region9: #{simple_model_forward.1} parent=0 // pred_fallthru
    _
  // Predicated region
  $region10: #{simple_model_forward.1} parent=0 // pred_check
    _
  $region11: #{simple_model_forward.1} parent=0 // pred_check_branch
    %19 = sbr.rel (0) target = $region13
  $region12: #{simple_model_forward.1} parent=0 // pred_region
    _
  $region13: #{simple_model_forward.1} parent=0 // pred_fallthru
    _
  // Predicated region
  $region14: #{simple_model_forward.1} parent=0 // pred_check
    _
  $region15: #{simple_model_forward.1} parent=0 // pred_check_branch
    %21 = sbr.rel (0) target = $region17
  $region16: #{simple_model_forward.1} parent=0 // pred_region
    _
  $region17: #{simple_model_forward.1} parent=0 // pred_fallthru
    _
  // Predicated region
  $region18: #{simple_model_forward.1} parent=0 // pred_check
    _
  $region19: #{simple_model_forward.1} parent=0 // pred_check_branch
    %23 = sbr.rel (0) target = $region21
  $region20: #{simple_model_forward.1} parent=0 // pred_region
    _
  $region21: #{simple_model_forward.1} parent=0 // pred_fallthru
    _
  // Predicated region
  $region22: #{simple_model_forward.1} parent=0 // pred_check
    _
  $region23: #{simple_model_forward.1} parent=0 // pred_check_branch
    %25 = sbr.rel (0) target = $region25
  $region24: #{simple_model_forward.1} parent=0 // pred_region
    _
  $region25: #{simple_model_forward.1} parent=0 // pred_fallthru
    _
  // Predicated region
  $region26: #{simple_model_forward.1} parent=0 // pred_check
    _
  $region27: #{simple_model_forward.1} parent=0 // pred_check_branch
    %27 = sbr.rel (0) target = $region29
  $region28: #{simple_model_forward.1} parent=0 // pred_region
    _
  $region29: #{simple_model_forward.1} parent=0 // pred_fallthru
    _
  %v28 = vld [vmem:[%s1] sm:$0xff]
  %v29 = vld [vmem:[%s1 + $0x8] sm:$0xff]
  %v30 = vld [vmem:[%s2] sm:$0xff]
  %v31 = vld [vmem:[%s2 + $0x8] sm:$0xff]
  %v32 = vld [vmem:[%s3] sm:$0xff]
  %v33 = vld [vmem:[%s3 + $0x8] sm:$0xff]
  %v34 = vld [vmem:[%s4] sm:$0xff]
  %v35 = vld [vmem:[%s4 + $0x8] sm:$0xff]
  %v36 = vld [vmem:[%s5] sm:$0xff]
  %v37 = vld [vmem:[%s5 + $0x8] sm:$0xff]
  %v38 = vld [vmem:[#allocation2] sm:$0x1]
  %v39 = vld [vmem:[%s0] sm:$0xff]
  %41 = vset.pattern.permute.xlu0 0
  %42 = vperm.xlu0 %41, %v28
  %v43 = vpop.permute.xlu0 %42
  %46 = vset.pattern.permute.xlu0 0
  %47 = vperm.xlu0 %46, %v29
  %v48 = vpop.permute.xlu0 %47
  %v51 = vlaneseq
  %v52 = vshrl.u32 %v51, 7
  %v53 = vsub.s32 0, %v52
  %v54 = vrot.slane %v39, %v53
  %v55 = vlaneseq
  %v56 = vshrl.u32 %v55, 7
  %v57 = vsub.s32 2, %v56
  %v58 = vrot.slane %v39, %v57
  %v59 = vlaneseq
  %v60 = vshrl.u32 %v59, 7
  %v61 = vsub.s32 4, %v60
  %v62 = vrot.slane %v39, %v61
  %v63 = vlaneseq
  %v64 = vshrl.u32 %v63, 7
  %v65 = vsub.s32 6, %v64
  %v66 = vrot.slane %v39, %v65
  %v71 = vlaneseq
  %v72 = vshrl.u32 %v71, 7
  %v73 = vsub.s32 0, %v72
  %v74 = vrot.slane %v54, %v73
  %v75 = vlaneseq
  %v76 = vshrl.u32 %v75, 7
  %v77 = vsub.s32 0, %v76
  %v78 = vrot.slane %v58, %v77
  %v79 = vlaneseq
  %v80 = vshrl.u32 %v79, 7
  %v81 = vsub.s32 0, %v80
  %v82 = vrot.slane %v62, %v81
  %v83 = vlaneseq
  %v84 = vshrl.u32 %v83, 7
  %v85 = vsub.s32 0, %v84
  %v86 = vrot.slane %v66, %v85
  %v87 = vmul.f32 %v43, %v74
  %v88 = vmul.f32 %v43, %v78
  %v89 = vmul.f32 %v43, %v82
  %v90 = vmul.f32 %v43, %v86
  %v91 = vmul.f32 %v48, %v74
  %v92 = vmul.f32 %v48, %v78
  %v93 = vmul.f32 %v48, %v82
  %v94 = vmul.f32 %v48, %v86
  %95 = vset.pattern.permute.xlu0 1
  %96 = vperm.xlu0 %95, %v28
  %v97 = vpop.permute.xlu0 %96
  %99 = vset.pattern.permute.xlu0 1
  %100 = vperm.xlu0 %99, %v29
  %v101 = vpop.permute.xlu0 %100
  %v103 = vlaneseq
  %v104 = vshrl.u32 %v103, 7
  %v105 = vsub.s32 1, %v104
  %v106 = vrot.slane %v39, %v105
  %v107 = vlaneseq
  %v108 = vshrl.u32 %v107, 7
  %v109 = vsub.s32 3, %v108
  %v110 = vrot.slane %v39, %v109
  %v111 = vlaneseq
  %v112 = vshrl.u32 %v111, 7
  %v113 = vsub.s32 5, %v112
  %v114 = vrot.slane %v39, %v113
  %v115 = vlaneseq
  %v116 = vshrl.u32 %v115, 7
  %v117 = vsub.s32 7, %v116
  %v118 = vrot.slane %v39, %v117
  %v123 = vlaneseq
  %v124 = vshrl.u32 %v123, 7
  %v125 = vsub.s32 1, %v124
  %v126 = vrot.slane %v106, %v125
  %v127 = vlaneseq
  %v128 = vshrl.u32 %v127, 7
  %v129 = vsub.s32 1, %v128
  %v130 = vrot.slane %v110, %v129
  %v131 = vlaneseq
  %v132 = vshrl.u32 %v131, 7
  %v133 = vsub.s32 1, %v132
  %v134 = vrot.slane %v114, %v133
  %v135 = vlaneseq
  %v136 = vshrl.u32 %v135, 7
  %v137 = vsub.s32 1, %v136
  %v138 = vrot.slane %v118, %v137
  %v139 = vmul.f32 %v97, %v126
  %v140 = vmul.f32 %v97, %v130
  %v141 = vmul.f32 %v97, %v134
  %v142 = vmul.f32 %v97, %v138
  %v143 = vmul.f32 %v101, %v126
  %v144 = vmul.f32 %v101, %v130
  %v145 = vmul.f32 %v101, %v134
  %v146 = vmul.f32 %v101, %v138
  %v147 = vadd.f32 %v87, %v139
  %v148 = vadd.f32 %v88, %v140
  %v149 = vadd.f32 %v89, %v141
  %v150 = vadd.f32 %v90, %v142
  %v151 = vadd.f32 %v91, %v143
  %v152 = vadd.f32 %v92, %v144
  %v153 = vadd.f32 %v93, %v145
  %v154 = vadd.f32 %v94, %v146
  %156 = vset.pattern.permute.xlu0 0
  %157 = vperm.xlu0 %156, %v30
  %v158 = vpop.permute.xlu0 %157
  %161 = vset.pattern.permute.xlu0 0
  %162 = vperm.xlu0 %161, %v31
  %v163 = vpop.permute.xlu0 %162
  %v165 = vadd.f32 %v147, %v158
  %v166 = vadd.f32 %v148, %v158
  %v167 = vadd.f32 %v149, %v158
  %v168 = vadd.f32 %v150, %v158
  %v169 = vadd.f32 %v151, %v163
  %v170 = vadd.f32 %v152, %v163
  %v171 = vadd.f32 %v153, %v163
  %v172 = vadd.f32 %v154, %v163
  %v173 = vmax.f32 %v165, 0.0
  %v174 = vmax.f32 %v166, 0.0
  %v175 = vmax.f32 %v167, 0.0
  %v176 = vmax.f32 %v168, 0.0
  %v177 = vmax.f32 %v169, 0.0
  %v178 = vmax.f32 %v170, 0.0
  %v179 = vmax.f32 %v171, 0.0
  %v180 = vmax.f32 %v172, 0.0
  %182 = vset.pattern.permute.xlu0 0
  %183 = vperm.xlu0 %182, %v34
  %v184 = vpop.permute.xlu0 %183
  %187 = vset.pattern.permute.xlu0 0
  %188 = vperm.xlu0 %187, %v35
  %v189 = vpop.permute.xlu0 %188
  %vm191 = vcmask 130048
  %v193 = vsel %vm191, %v32, 0
  %v196 = vsel %vm191, %v33, 0
  %198 = vmatprep.subr.mxu0 0.0
  %199 = vmatpush1.msra.mxu0 0.0
  %200 = vmatprep.subr.mxu0 0.0
  %201 = vmatpush1.msra.mxu0 0.0
  %202 = vmatprep.subr.mxu0 0.0
  %203 = vmatpush1.msra.mxu0 0.0
  %204 = vmatprep.subr.mxu0 0.0
  %205 = vmatpush1.msra.mxu0 0.0
  %206 = vmatprep.subr.mxu0 0.0
  %207 = vmatpush1.msra.mxu0 0.0
  %208 = vmatprep.subr.mxu0 0.0
  %209 = vmatpush1.msra.mxu0 0.0
  %210 = vmatprep.subr.mxu0 0.0
  %211 = vmatpush1.msra.mxu0 0.0
  %212 = vmatprep.subr.mxu0 0.0
  %213 = vmatpush1.msra.mxu0 0.0
  %214 = vmatprep.subr.mxu0 0.0
  %215 = vmatpush1.msra.mxu0 0.0
  %216 = vmatprep.subr.mxu0 0.0
  %217 = vmatpush1.msra.mxu0 0.0
  %218 = vmatprep.subr.mxu0 0.0
  %219 = vmatpush1.msra.mxu0 0.0
  %220 = vmatprep.subr.mxu0 0.0
  %221 = vmatpush1.msra.mxu0 0.0
  %222 = vmatprep.subr.mxu0 0.0
  %223 = vmatpush1.msra.mxu0 0.0
  %224 = vmatprep.subr.mxu0 0.0
  %225 = vmatpush1.msra.mxu0 0.0
  %226 = vmatprep.subr.mxu0 %v178
  %227 = vmatpush1.msra.mxu0 %v177
  %228 = vmatprep.subr.mxu0 %v174
  %229 = vmatpush1.msra.mxu0 %v173
  %230 = vmatprep.subr.mxu0 0.0
  %231 = vmatpush2.msra.mxu0 0.0
  %232 = vmatprep.subr.mxu0 0.0
  %233 = vmatpush2.msra.mxu0 0.0
  %234 = vmatprep.subr.mxu0 0.0
  %235 = vmatpush2.msra.mxu0 0.0
  %236 = vmatprep.subr.mxu0 0.0
  %237 = vmatpush2.msra.mxu0 0.0
  %238 = vmatprep.subr.mxu0 0.0
  %239 = vmatpush2.msra.mxu0 0.0
  %240 = vmatprep.subr.mxu0 0.0
  %241 = vmatpush2.msra.mxu0 0.0
  %242 = vmatprep.subr.mxu0 0.0
  %243 = vmatpush2.msra.mxu0 0.0
  %244 = vmatprep.subr.mxu0 0.0
  %245 = vmatpush2.msra.mxu0 0.0
  %246 = vmatprep.subr.mxu0 0.0
  %247 = vmatpush2.msra.mxu0 0.0
  %248 = vmatprep.subr.mxu0 0.0
  %249 = vmatpush2.msra.mxu0 0.0
  %250 = vmatprep.subr.mxu0 0.0
  %251 = vmatpush2.msra.mxu0 0.0
  %252 = vmatprep.subr.mxu0 0.0
  %253 = vmatpush2.msra.mxu0 0.0
  %254 = vmatprep.subr.mxu0 0.0
  %255 = vmatpush2.msra.mxu0 0.0
  %256 = vmatprep.subr.mxu0 0.0
  %257 = vmatpush2.msra.mxu0 0.0
  %258 = vmatprep.subr.mxu0 0.0
  %259 = vmatpush2.msra.mxu0 0.0
  %260 = vmatprep.subr.mxu0 0.0
  %261 = vmatpush2.msra.mxu0 0.0
  %262 = vmatprep.mubr.f32.mxu0 0.0
  %263 = vmatmul.mubr.f32.gmra.mxu0 %v193
  %v264 = vpop.f32.mrf.mxu0
  %v265 = vadd.f32 %v184, %v264
  %v266 = vpop.f32.mrf.mxu0
  %v267 = vadd.f32 %v184, %v266
  %268 = vmatprep.mubr.f32.mxu0 0.0
  %269 = vmatmul.mubr.f32.gmra.mxu0 %v196
  %v270 = vpop.f32.mrf.mxu0
  %v271 = vadd.f32 %v189, %v270
  %v272 = vpop.f32.mrf.mxu0
  %v273 = vadd.f32 %v189, %v272
  %274 = vdwg.mxu0
  %275 = vmatprep.subr.mxu0 0.0
  %276 = vmatpush1.msra.mxu0 0.0
  %277 = vmatprep.subr.mxu0 0.0
  %278 = vmatpush1.msra.mxu0 0.0
  %279 = vmatprep.subr.mxu0 0.0
  %280 = vmatpush1.msra.mxu0 0.0
  %281 = vmatprep.subr.mxu0 0.0
  %282 = vmatpush1.msra.mxu0 0.0
  %283 = vmatprep.subr.mxu0 0.0
  %284 = vmatpush1.msra.mxu0 0.0
  %285 = vmatprep.subr.mxu0 0.0
  %286 = vmatpush1.msra.mxu0 0.0
  %287 = vmatprep.subr.mxu0 0.0
  %288 = vmatpush1.msra.mxu0 0.0
  %289 = vmatprep.subr.mxu0 0.0
  %290 = vmatpush1.msra.mxu0 0.0
  %291 = vmatprep.subr.mxu0 0.0
  %292 = vmatpush1.msra.mxu0 0.0
  %293 = vmatprep.subr.mxu0 0.0
  %294 = vmatpush1.msra.mxu0 0.0
  %295 = vmatprep.subr.mxu0 0.0
  %296 = vmatpush1.msra.mxu0 0.0
  %297 = vmatprep.subr.mxu0 0.0
  %298 = vmatpush1.msra.mxu0 0.0
  %299 = vmatprep.subr.mxu0 0.0
  %300 = vmatpush1.msra.mxu0 0.0
  %301 = vmatprep.subr.mxu0 0.0
  %302 = vmatpush1.msra.mxu0 0.0
  %303 = vmatprep.subr.mxu0 %v180
  %304 = vmatpush1.msra.mxu0 %v179
  %305 = vmatprep.subr.mxu0 %v176
  %306 = vmatpush1.msra.mxu0 %v175
  %307 = vmatprep.subr.mxu0 0.0
  %308 = vmatpush2.msra.mxu0 0.0
  %309 = vmatprep.subr.mxu0 0.0
  %310 = vmatpush2.msra.mxu0 0.0
  %311 = vmatprep.subr.mxu0 0.0
  %312 = vmatpush2.msra.mxu0 0.0
  %313 = vmatprep.subr.mxu0 0.0
  %314 = vmatpush2.msra.mxu0 0.0
  %315 = vmatprep.subr.mxu0 0.0
  %316 = vmatpush2.msra.mxu0 0.0
  %317 = vmatprep.subr.mxu0 0.0
  %318 = vmatpush2.msra.mxu0 0.0
  %319 = vmatprep.subr.mxu0 0.0
  %320 = vmatpush2.msra.mxu0 0.0
  %321 = vmatprep.subr.mxu0 0.0
  %322 = vmatpush2.msra.mxu0 0.0
  %323 = vmatprep.subr.mxu0 0.0
  %324 = vmatpush2.msra.mxu0 0.0
  %325 = vmatprep.subr.mxu0 0.0
  %326 = vmatpush2.msra.mxu0 0.0
  %327 = vmatprep.subr.mxu0 0.0
  %328 = vmatpush2.msra.mxu0 0.0
  %329 = vmatprep.subr.mxu0 0.0
  %330 = vmatpush2.msra.mxu0 0.0
  %331 = vmatprep.subr.mxu0 0.0
  %332 = vmatpush2.msra.mxu0 0.0
  %333 = vmatprep.subr.mxu0 0.0
  %334 = vmatpush2.msra.mxu0 0.0
  %335 = vmatprep.subr.mxu0 0.0
  %336 = vmatpush2.msra.mxu0 0.0
  %337 = vmatprep.subr.mxu0 0.0
  %338 = vmatpush2.msra.mxu0 0.0
  %339 = vmatprep.mubr.f32.mxu0 0.0
  %340 = vmatmul.mubr.f32.gmra.mxu0 %v193
  %v341 = vpop.f32.mrf.mxu0
  %v342 = vadd.f32 %v184, %v341
  %v343 = vpop.f32.mrf.mxu0
  %v344 = vadd.f32 %v184, %v343
  %345 = vmatprep.mubr.f32.mxu0 0.0
  %346 = vmatmul.mubr.f32.gmra.mxu0 %v196
  %v347 = vpop.f32.mrf.mxu0
  %v348 = vadd.f32 %v189, %v347
  %v349 = vpop.f32.mrf.mxu0
  %v350 = vadd.f32 %v189, %v349
  %351 = vdwg.mxu0
  %v352 = vmax.f32 %v265, 0.0
  %v353 = vmax.f32 %v267, 0.0
  %v354 = vmax.f32 %v342, 0.0
  %v355 = vmax.f32 %v344, 0.0
  %v356 = vmax.f32 %v271, 0.0
  %v357 = vmax.f32 %v273, 0.0
  %v358 = vmax.f32 %v348, 0.0
  %v359 = vmax.f32 %v350, 0.0
  %361 = vset.pattern.permute.xlu0 0
  %362 = vperm.xlu0 %361, %v36
  %v363 = vpop.permute.xlu0 %362
  %366 = vset.pattern.permute.xlu0 0
  %367 = vperm.xlu0 %366, %v37
  %v368 = vpop.permute.xlu0 %367
  %v370 = vmul.f32 %v363, %v352
  %v371 = vmul.f32 %v363, %v353
  %v372 = vmul.f32 %v363, %v354
  %v373 = vmul.f32 %v363, %v355
  %v374 = vmul.f32 %v368, %v356
  %v375 = vmul.f32 %v368, %v357
  %v376 = vmul.f32 %v368, %v358
  %v377 = vmul.f32 %v368, %v359
  %v378 = vadd.f32 %v370, %v374
  %v379 = vrot.slane %v378, 4
  %v380 = vadd.f32 %v378, %v379
  %v381 = vrot.slane %v380, 2
  %v382 = vadd.f32 %v380, %v381
  %v383 = vrot.slane %v382, 1
  %v384 = vadd.f32 %v382, %v383
  %v385 = vadd.f32 %v371, %v375
  %v386 = vrot.slane %v385, 4
  %v387 = vadd.f32 %v385, %v386
  %v388 = vrot.slane %v387, 2
  %v389 = vadd.f32 %v387, %v388
  %v390 = vrot.slane %v389, 1
  %v391 = vadd.f32 %v389, %v390
  %v392 = vadd.f32 %v372, %v376
  %v393 = vrot.slane %v392, 4
  %v394 = vadd.f32 %v392, %v393
  %v395 = vrot.slane %v394, 2
  %v396 = vadd.f32 %v394, %v395
  %v397 = vrot.slane %v396, 1
  %v398 = vadd.f32 %v396, %v397
  %v399 = vadd.f32 %v373, %v377
  %v400 = vrot.slane %v399, 4
  %v401 = vadd.f32 %v399, %v400
  %v402 = vrot.slane %v401, 2
  %v403 = vadd.f32 %v401, %v402
  %v404 = vrot.slane %v403, 1
  %v405 = vadd.f32 %v403, %v404
  %407 = vset.pattern.permute.xlu0 0
  %408 = vperm.xlu0 %407, %v38
  %v409 = vpop.permute.xlu0 %408
  %v411 = vlaneseq
  %v412 = vshrl.u32 %v411, 7
  %v413 = vsub.s32 0, %v412
  %v414 = vrot.slane %v409, %v413
  %v415 = vadd.f32 %v384, %v414
  %v416 = vadd.f32 %v391, %v414
  %v417 = vadd.f32 %v398, %v414
  %v418 = vadd.f32 %v405, %v414
  %v423 = vcombine.low %v415, %v416
  %v424 = vcombine.low %v417, %v418
  %v426 = vunpack.c.l.s4 1966171168
  %v427 = vunpack.c.0.s8 %v426
  %v428 = vlaneseq
  %v429 = vshrl.u32 %v428, 7
  %v430 = vsub.s32 %v427, %v429
  %v431 = vrot.slane %v423, %v430
  %v433 = vunpack.c.l.s4 1966171168
  %v434 = vunpack.c.0.s8 %v433
  %v435 = vlaneseq
  %v436 = vshrl.u32 %v435, 7
  %v437 = vsub.s32 %v434, %v436
  %v438 = vrot.slane %v424, %v437
  %v439 = vcombine.low %v431, %v438
  %v441 = vunpack.c.l.s4 1966171168
  %v442 = vunpack.c.0.s8 %v441
  %v443 = vlaneseq
  %v444 = vshrl.u32 %v443, 7
  %v445 = vsub.s32 %v442, %v444
  %v446 = vrot.slane %v439, %v445
  %v448 = vlaneseq
  %vm449 = vcmp.ge.s32.totalorder %v448, 0
  %vm450 = vcmp.lt.s32.totalorder %v448, 512
  %vm451 = vmand %vm449, %vm450
  %452 = vst.msk [vmem:[%s7] sm:$0xf] %vm451, %v446
  // Predicated region
  $region30: #{simple_model_forward.1} parent=0 // pred_check
    _
  $region31: #{simple_model_forward.1} parent=0 // pred_check_branch
    %454 = sbr.rel (0) target = $region33
  $region32: #{simple_model_forward.1} parent=0 // pred_region
    _
  $region33: #{simple_model_forward.1} parent=0 // pred_fallthru
    _
  // Predicated region
  $region34: #{simple_model_forward.1} parent=0 // pred_check
    _
  $region35: #{simple_model_forward.1} parent=0 // pred_check_branch
    %456 = sbr.rel (0) target = $region37
  $region36: #{simple_model_forward.1} parent=0 // pred_region
    _
  $region37: #{simple_model_forward.1} parent=0 // pred_fallthru
    _

</llo_original>
